<compile_context>
chip_gen: v7x
topology: tpu7x:2x2x1
jax: 0.10.0
libtpu: 0.0.40
codegen_flags: <defaults>
</compile_context>

<pallas_src>
import functools
import math

import jax
import jax.numpy as jnp
from jax import lax
from jax.experimental import pallas as pl
from jax.experimental.pallas import tpu as pltpu


_VMEM_LIMIT_BYTES = 32 * 1024 * 1024


def _pick_tile(n, target):
    """Largest tile <= target that divides n (real configs should be aligned
    so this returns `target`; tiny demo shapes degenerate to the full dim)."""
    if n <= target:
        return n
    if n % target == 0:
        return target
    return math.gcd(n, target)


# ---------------------------------------------------------------------------
# 1 & 3) tiled linear kernel:  out[rows, N] = x[rows, K] @ w_t[K, N] + b[1, N]
# ---------------------------------------------------------------------------
def _linear_kernel(x_ref, w_ref, b_ref, o_ref, *, compute_dtype):
    x = x_ref[...].astype(compute_dtype)
    w = w_ref[...].astype(compute_dtype)          # already (K, N): no transpose
    acc = jnp.dot(x, w, preferred_element_type=jnp.float32)
    o_ref[...] = (acc + b_ref[...]).astype(o_ref.dtype)


def _linear(x2d, w_t, b, *, out_dtype, compute_dtype,
            tm_target=256, tn_target=512):
    rows, kin = x2d.shape
    kin2, n = w_t.shape
    assert kin == kin2
    tm = _pick_tile(rows, tm_target)
    tn = _pick_tile(n, tn_target)
    kernel = functools.partial(_linear_kernel, compute_dtype=compute_dtype)
    return pl.pallas_call(
        kernel,
        out_shape=jax.ShapeDtypeStruct((rows, n), out_dtype),
        grid=(rows // tm, n // tn),
        in_specs=[
            pl.BlockSpec((tm, kin), lambda i, j: (i, 0)),   # activations
            pl.BlockSpec((kin, tn), lambda i, j: (0, j)),   # pre-transposed W
            pl.BlockSpec((1, tn), lambda i, j: (0, j)),     # bias (f32)
        ],
        out_specs=pl.BlockSpec((tm, tn), lambda i, j: (i, j)),
        compiler_params=pltpu.CompilerParams(
            dimension_semantics=("parallel", "parallel"),
            vmem_limit_bytes=_VMEM_LIMIT_BYTES),
    )(x2d, w_t, b)


# ---------------------------------------------------------------------------
# 2) flash-style causal attention over (B, H, q-tile, kv-tile)
# ---------------------------------------------------------------------------
def _flash_kernel(q_ref, k_ref, v_ref, o_ref, m_ref, l_ref, acc_ref,
                  *, tq, tk, scale, compute_dtype):
    qi = pl.program_id(2)
    ki = pl.program_id(3)
    nk = pl.num_programs(3)

    @pl.when(ki == 0)
    def _init():
        m_ref[...] = jnp.full(m_ref.shape, -jnp.inf, dtype=m_ref.dtype)
        l_ref[...] = jnp.zeros(l_ref.shape, dtype=l_ref.dtype)
        acc_ref[...] = jnp.zeros(acc_ref.shape, dtype=acc_ref.dtype)

    q_start = qi * tq
    k_start = ki * tk

    # Skip kv tiles strictly above the causal diagonal (no valid keys there).
    @pl.when(k_start <= q_start + (tq - 1))
    def _compute():
        # Fold 1/sqrt(D) into q in f32 (precision), then cast MXU operands.
        q = (q_ref[...].astype(jnp.float32) * scale).astype(compute_dtype)  # (tq, D)
        k = k_ref[...].astype(compute_dtype)                                # (tk, D)
        v = v_ref[...].astype(compute_dtype)                                # (tk, D)

        # q @ k^T without an explicit transpose: contract the last dims.
        s = lax.dot_general(q, k, (((1,), (1,)), ((), ())),
                            preferred_element_type=jnp.float32)  # (tq, tk) f32

        def online_update(s_val):
            m_prev = m_ref[...]
            m_new = jnp.maximum(m_prev, jnp.max(s_val, axis=-1, keepdims=True))
            alpha = jnp.exp(m_prev - m_new)
            p = jnp.exp(s_val - m_new)                        # f32 softmax math
            l_ref[...] = alpha * l_ref[...] + jnp.sum(p, axis=-1, keepdims=True)
            acc_ref[...] = alpha * acc_ref[...] + jnp.dot(
                p.astype(compute_dtype), v, preferred_element_type=jnp.float32)
            m_ref[...] = m_new

        # Only diagonal-straddling tiles need the iota mask; fully-below-diagonal
        # tiles take the cheap unmasked path.
        needs_mask = (k_start + (tk - 1)) > q_start

        @pl.when(needs_mask)
        def _masked():
            row = q_start + lax.broadcasted_iota(jnp.int32, (tq, tk), 0)
            col = k_start + lax.broadcasted_iota(jnp.int32, (tq, tk), 1)
            online_update(jnp.where(row >= col, s, -1e30))

        @pl.when(jnp.logical_not(needs_mask))
        def _unmasked():
            online_update(s)

    @pl.when(ki == nk - 1)
    def _finalize():
        inv_l = pl.reciprocal(l_ref[...], approx=True)        # EUP, frees VALU
        o_ref[...] = (acc_ref[...] * inv_l).astype(o_ref.dtype)


def _flash_attention(q, k, v, *, scale, compute_dtype,
                     tq_target=256, tk_target=512):
    B, H, T, D = q.shape
    tq = _pick_tile(T, tq_target)
    tk = _pick_tile(T, tk_target)
    kernel = functools.partial(_flash_kernel, tq=tq, tk=tk, scale=scale,
                               compute_dtype=compute_dtype)
    q_spec = pl.BlockSpec((None, None, tq, D), lambda b, h, i, j: (b, h, i, 0))
    kv_spec = pl.BlockSpec((None, None, tk, D), lambda b, h, i, j: (b, h, j, 0))
    return pl.pallas_call(
        kernel,
        out_shape=jax.ShapeDtypeStruct((B, H, T, D), q.dtype),
        grid=(B, H, T // tq, T // tk),
        in_specs=[q_spec, kv_spec, kv_spec],
        out_specs=q_spec,
        scratch_shapes=[
            pltpu.VMEM((tq, 1), jnp.float32),   # running max  m
            pltpu.VMEM((tq, 1), jnp.float32),   # running sum  l
            pltpu.VMEM((tq, D), jnp.float32),   # f32 output accumulator
        ],
        compiler_params=pltpu.CompilerParams(
            # B / head / q-tile are independent (megacore-parallel on v7x);
            # kv is the online-softmax reduction axis and must be last.
            dimension_semantics=("parallel", "parallel", "parallel", "arbitrary"),
            vmem_limit_bytes=_VMEM_LIMIT_BYTES),
    )(q, k, v)


# ---------------------------------------------------------------------------
# full module forward
# ---------------------------------------------------------------------------
def causal_self_attention(x, w_attn, b_attn, w_proj, b_proj, *, n_head,
                          compute_dtype=None):
    """nanoGPT CausalSelfAttention forward (dropout=0 / eval mode).

    x:       (B, T, C)
    w_attn:  (3C, C)  nn.Linear weight layout (out, in)
    b_attn:  (3C,) or (1, 3C)
    w_proj:  (C, C)
    b_proj:  (C,) or (1, C)
    compute_dtype: MXU operand dtype (jnp.bfloat16 recommended on v5e/v6e/v7x;
        softmax / accumulation stay f32).  None -> x.dtype.
    """
    B, T, C = x.shape
    H = n_head
    assert C % H == 0
    D = C // H
    if compute_dtype is None:
        compute_dtype = x.dtype

    # Pre-transpose weights once in the wrapper (no in-kernel .T / XLU work),
    # cast to the MXU compute dtype (halves weight DMA when bf16).
    w_attn_t = w_attn.T.astype(compute_dtype)              # (C, 3C)
    w_proj_t = w_proj.T.astype(compute_dtype)              # (C, C)
    b_attn_f = b_attn.reshape(1, 3 * C).astype(jnp.float32)
    b_proj_f = b_proj.reshape(1, C).astype(jnp.float32)

    # 1) QKV projection (lane-dense (rows, 3C) output).
    qkv = _linear(x.reshape(B * T, C), w_attn_t, b_attn_f,
                  out_dtype=compute_dtype, compute_dtype=compute_dtype)

    # Head split: wrapper-side layout plumbing -> (B, H, T, D) slabs whose last
    # dim is the full head_dim (BlockSpec-clean for the attention kernel).
    qkv = qkv.reshape(B, T, 3, H, D)
    q = jnp.transpose(qkv[:, :, 0], (0, 2, 1, 3))
    k = jnp.transpose(qkv[:, :, 1], (0, 2, 1, 3))
    v = jnp.transpose(qkv[:, :, 2], (0, 2, 1, 3))

    # 2) causal flash attention (online softmax, causal tile skipping).
    y = _flash_attention(q, k, v, scale=1.0 / math.sqrt(D),
                         compute_dtype=compute_dtype)

    # merge heads back to (B*T, C) and 3) project back to x.dtype.
    y2d = jnp.transpose(y, (0, 2, 1, 3)).reshape(B * T, C)
    out = _linear(y2d, w_proj_t, b_proj_f,
                  out_dtype=x.dtype, compute_dtype=compute_dtype)
    return out.reshape(B, T, C)


# ---------------------------------------------------------------------------
# pure-JAX reference (mirrors the PyTorch module, dropout=0)
# ---------------------------------------------------------------------------
def _reference(x, w_attn, b_attn, w_proj, b_proj, n_head):
    B, T, C = x.shape
    D = C // n_head
    qkv = x @ w_attn.T + b_attn.reshape(-1)
    q, k, v = jnp.split(qkv, 3, axis=-1)
    q = q.reshape(B, T, n_head, D).transpose(0, 2, 1, 3)
    k = k.reshape(B, T, n_head, D).transpose(0, 2, 1, 3)
    v = v.reshape(B, T, n_head, D).transpose(0, 2, 1, 3)
    s = jnp.einsum('bhtd,bhsd->bhts', q, k) / math.sqrt(D)
    mask = jnp.tril(jnp.ones((T, T), dtype=bool))
    s = jnp.where(mask, s, -jnp.inf)
    p = jax.nn.softmax(s, axis=-1)
    y = jnp.einsum('bhts,bhsd->bhtd', p, v)
    y = y.transpose(0, 2, 1, 3).reshape(B, T, C)
    return y @ w_proj.T + b_proj.reshape(-1)


if __name__ == "__main__":
    # demo config: n_embd=32, n_head=4, T=8, B=2 (bias=True, dropout=0.0).
    # NOTE: real configs should use C a multiple of 128 and T a multiple of the
    # tile targets so blocks are lane/sublane aligned; the tiny demo shapes
    # simply degenerate to a single tile per kernel.
    B, T, C, n_head = 2, 8, 32, 4

    key = jax.random.PRNGKey(0)
    k1, k2, k3, k4, k5 = jax.random.split(key, 5)
    x = jax.random.normal(k1, (B, T, C), dtype=jnp.float32)
    w_attn = jax.random.normal(k2, (3 * C, C), dtype=jnp.float32) * 0.02
    b_attn = jax.random.normal(k3, (1, 3 * C), dtype=jnp.float32) * 0.02
    w_proj = jax.random.normal(k4, (C, C), dtype=jnp.float32) * 0.02
    b_proj = jax.random.normal(k5, (1, C), dtype=jnp.float32) * 0.02

    y_ref = _reference(x, w_attn, b_attn, w_proj, b_proj, n_head)

    # f32 MXU path: matches the reference tightly.
    y = causal_self_attention(x, w_attn, b_attn, w_proj, b_proj, n_head=n_head)
    y = jax.block_until_ready(y)
    assert y.shape == (B, T, C)
    assert jnp.allclose(y, y_ref, atol=1e-3, rtol=1e-3), "f32 path mismatch vs reference"

    # bf16 MXU path (full-rate MXU on v6e/v7x): looser tolerance.
    y_bf16 = causal_self_attention(x, w_attn, b_attn, w_proj, b_proj,
                                   n_head=n_head, compute_dtype=jnp.bfloat16)
    y_bf16 = jax.block_until_ready(y_bf16)
    assert jnp.allclose(y_bf16.astype(jnp.float32), y_ref, atol=2e-2, rtol=2e-2), \
        "bf16 path mismatch vs reference"

    print("KERNEL_OK")
</pallas_src>

<mosaic_0001>
module attributes {stable_mosaic.version = 11 : i64} {
  func.func @_linear_kernel(%arg0: i32, %arg1: i32, %arg2: memref<16x32xf32, #tpu.memory_space<vmem>>, %arg3: memref<32x96xf32, #tpu.memory_space<vmem>>, %arg4: memref<1x96xf32, #tpu.memory_space<vmem>>, %arg5: memref<16x96xf32, #tpu.memory_space<vmem>>) attributes {dimension_semantics = [#tpu.dimension_semantics<parallel>, #tpu.dimension_semantics<parallel>], iteration_bounds = array<i64: 1, 1>, scalar_prefetch = 0 : i64, scratch_operands = 0 : i64, tpu.core_type = #tpu.core_type<tc>, window_params = [{transform_indices = @transform_0, window_bounds = array<i64: 16, 32>}, {transform_indices = @transform_1, window_bounds = array<i64: 32, 96>}, {transform_indices = @transform_2, window_bounds = array<i64: 1, 96>}, {transform_indices = @transform_3, window_bounds = array<i64: 16, 96>}]} {
    %c0 = arith.constant 0 : index
    %c0_0 = arith.constant 0 : index
    %0 = vector.load %arg2[%c0, %c0_0] : memref<16x32xf32, #tpu.memory_space<vmem>>, vector<16x32xf32>
    %c0_1 = arith.constant 0 : index
    %c0_2 = arith.constant 0 : index
    %1 = vector.load %arg3[%c0_1, %c0_2] : memref<32x96xf32, #tpu.memory_space<vmem>>, vector<32x96xf32>
    %cst = arith.constant dense<0.000000e+00> : vector<16x96xf32>
    %2 = tpu.matmul %0, %1, %cst {dimension_numbers = #tpu.dot_dimension_numbers<[1], [0], [0], [1], [0, 0, 1, 1], [], []>} : vector<16x32xf32>, vector<32x96xf32>, vector<16x96xf32> -> vector<16x96xf32>
    %c0_3 = arith.constant 0 : index
    %c0_4 = arith.constant 0 : index
    %3 = vector.load %arg4[%c0_3, %c0_4] : memref<1x96xf32, #tpu.memory_space<vmem>>, vector<1x96xf32>
    %4 = vector.broadcast %3 : vector<1x96xf32> to vector<16x96xf32>
    %5 = arith.addf %2, %4 : vector<16x96xf32>
    %c0_5 = arith.constant 0 : index
    %c0_6 = arith.constant 0 : index
    %6 = vector.load %arg5[%c0_5, %c0_6] : memref<16x96xf32, #tpu.memory_space<vmem>>, vector<16x96xf32>
    tpu.vector_store %arg5[%c0_5, %c0_6], %5 {strides = array<i32>} : memref<16x96xf32, #tpu.memory_space<vmem>>, vector<16x96xf32>,
    return
  }
  func.func @transform_0(%arg0: i32, %arg1: i32) -> (i32, i32) {
    %c0_i32 = arith.constant 0 : i32
    %c0_i32_0 = arith.constant 0 : i32
    return %arg0, %c0_i32 : i32, i32
  }
  func.func @transform_1(%arg0: i32, %arg1: i32) -> (i32, i32) {
    %c0_i32 = arith.constant 0 : i32
    %c0_i32_0 = arith.constant 0 : i32
    return %c0_i32, %arg1 : i32, i32
  }
  func.func @transform_2(%arg0: i32, %arg1: i32) -> (i32, i32) {
    %c0_i32 = arith.constant 0 : i32
    %c0_i32_0 = arith.constant 0 : i32
    return %c0_i32, %arg1 : i32, i32
  }
  func.func @transform_3(%arg0: i32, %arg1: i32) -> (i32, i32) {
    %c0_i32 = arith.constant 0 : i32
    return %arg0, %arg1 : i32, i32
  }
}

</mosaic_0001>

<llo_original>
// kernel: tpu_custom_call.1
$region0: #{tpu_custom_call.1}
  #allocation0 [shape = 'u32[]', space=smem, size = 0x4, offset = 0x4, fixed_abs, tag = 'smem constant byte address 0x4 - core index']
  #allocation1 [shape = 'u32[144,128]{1,0:T(1,128)}', space=vmem, size = 0x12000, scoped, tag = 'internal scratch']
  %s0 = inlined_call_operand.hbm [shape: f32[16,32], index: 0, kind: input, shape index: {}]
  %s1 = inlined_call_operand.hbm [shape: f32[32,96], index: 1, kind: input, shape index: {}]
  %s2 = inlined_call_operand.vmem [shape: f32[1,96], index: 2, kind: input, shape index: {}]
  %s3 = inlined_call_operand.hbm [shape: f32[16,96], index: 3, kind: output, shape index: {}]
  %s4 = sld [smem:[#allocation0]]
  $region30: #{tpu_custom_call.1} parent=0
    _
  %s6 = ssub.s32 1, %s4
  %s7 = scalar_select 0, %s6, %s4
  $region1: #{tpu_custom_call.1} parent=0
    #allocation2 [shape = 'u8[8192]{0}', space=vmem, size = 0x2000, scoped, tag = 'input window, operand 0, single buffered']
    #allocation3 [shape = 's32[1]{0}', space=sflag, size = 0x4, scoped, tag = 'scoped memory for tpu_custom_call.1']
    #allocation4 [shape = 's32[1]{0}', space=sflag, size = 0x4, scoped, tag = 'scoped memory for tpu_custom_call.1']
    #allocation5 [shape = 'u8[16384]{0}', space=vmem, size = 0x4000, scoped, tag = 'input window, operand 1, single buffered']
    #allocation6 [shape = 's32[1]{0}', space=sflag, size = 0x4, scoped, tag = 'scoped memory for tpu_custom_call.1']
    #allocation7 [shape = 'u8[8192]{0}', space=vmem, size = 0x2000, scoped, tag = 'output window, operand 0, single buffered']
    %8 = vsyncpa [#allocation3], 0
    %9 = vsyncpa [#allocation6], 0
    %10 = vsyncpa [#allocation4], 0
    // Predicated region
    $region2: #{tpu_custom_call.1} parent=1 // pred_check
      _
    $region3: #{tpu_custom_call.1} parent=1 // pred_check_branch
      %12 = sbr.rel (0) target = $region5
    $region4: #{tpu_custom_call.1} parent=1 // pred_region
      %s14 = ssub.s32 256, 256
      %15 = vsyncadd [#allocation3], %s14
      %s16 = sshll.u32 [#allocation2], 4
      %s17 = int_to_ptr.vmem [resolvable:$true] %s16
      %22 = dma.hbm_to_vmem [thread:$0]  %s0, 256, %s17, [#allocation3], 128, 128, 8
    $region5: #{tpu_custom_call.1} parent=1 // pred_fallthru
      _
    // Predicated region
    $region6: #{tpu_custom_call.1} parent=1 // pred_check
      _
    $region7: #{tpu_custom_call.1} parent=1 // pred_check_branch
      %24 = sbr.rel (0) target = $region9
    $region8: #{tpu_custom_call.1} parent=1 // pred_region
      %s26 = ssub.s32 512, 512
      %27 = vsyncadd [#allocation6], %s26
      %s28 = sshll.u32 [#allocation5], 4
      %s29 = int_to_ptr.vmem [resolvable:$true] %s28
      %34 = dma.hbm_to_vmem [thread:$0]  %s1, 512, %s29, [#allocation6], 128, 128, 8
    $region9: #{tpu_custom_call.1} parent=1 // pred_fallthru
      _
    // Predicated region
    $region10: #{tpu_custom_call.1} parent=1 // pred_check
      _
    $region11: #{tpu_custom_call.1} parent=1 // pred_check_branch
      %36 = sbr.rel (0) target = $region13
    $region12: #{tpu_custom_call.1} parent=1 // pred_region
      _
    $region13: #{tpu_custom_call.1} parent=1 // pred_fallthru
      _
    // Predicated region
    $region14: #{tpu_custom_call.1} parent=1 // pred_check
      _
    $region15: #{tpu_custom_call.1} parent=1 // pred_check_branch
      %38 = sbr.rel (0) target = $region17
    $region16: #{tpu_custom_call.1} parent=1 // pred_region
      %39 = dma.done [#allocation3], 256
    $region17: #{tpu_custom_call.1} parent=1 // pred_fallthru
      _
    // Predicated region
    $region18: #{tpu_custom_call.1} parent=1 // pred_check
      _
    $region19: #{tpu_custom_call.1} parent=1 // pred_check_branch
      %41 = sbr.rel (0) target = $region21
    $region20: #{tpu_custom_call.1} parent=1 // pred_region
      %42 = dma.done [#allocation6], 512
    $region21: #{tpu_custom_call.1} parent=1 // pred_fallthru
      _
    %v43 = vld [vmem:[#allocation2] sm:$0xff]
    %v44 = vld [vmem:[#allocation2 + $0x8] sm:$0xff]
    %v45 = vld [vmem:[#allocation5] sm:$0xff]
    %v46 = vld [vmem:[#allocation5 + $0x8] sm:$0xff]
    %v47 = vld [vmem:[#allocation5 + $0x10] sm:$0xff]
    %v48 = vld [vmem:[#allocation5 + $0x18] sm:$0xff]
    %v49 = vld [vmem:[%s2] sm:$0x1]
    %v51 = vlaneseq
    %v52 = vshrl.u32 %v51, 7
    %v53 = vsub.s32 0, %v52
    %v54 = vrot.slane %v49, %v53
    %vm56 = vcmask 261120
    %v58 = vsel %vm56, %v43, 0
    %v61 = vsel %vm56, %v44, 0
    %63 = vmatprep.subr.mxu0 0.0
    %64 = vmatpush1.msra.mxu0 %v45
    %65 = vmatprep.subr.mxu0 0.0
    %66 = vmatpush1.msra.mxu0 %v46
    %67 = vmatprep.subr.mxu0 0.0
    %68 = vmatpush1.msra.mxu0 %v47
    %69 = vmatprep.subr.mxu0 0.0
    %70 = vmatpush1.msra.mxu0 %v48
    %71 = vmatprep.subr.mxu0 0.0
    %72 = vmatpush1.msra.mxu0 0.0
    %73 = vmatprep.subr.mxu0 0.0
    %74 = vmatpush1.msra.mxu0 0.0
    %75 = vmatprep.subr.mxu0 0.0
    %76 = vmatpush1.msra.mxu0 0.0
    %77 = vmatprep.subr.mxu0 0.0
    %78 = vmatpush1.msra.mxu0 0.0
    %79 = vmatprep.subr.mxu0 0.0
    %80 = vmatpush1.msra.mxu0 0.0
    %81 = vmatprep.subr.mxu0 0.0
    %82 = vmatpush1.msra.mxu0 0.0
    %83 = vmatprep.subr.mxu0 0.0
    %84 = vmatpush1.msra.mxu0 0.0
    %85 = vmatprep.subr.mxu0 0.0
    %86 = vmatpush1.msra.mxu0 0.0
    %87 = vmatprep.subr.mxu0 0.0
    %88 = vmatpush1.msra.mxu0 0.0
    %89 = vmatprep.subr.mxu0 0.0
    %90 = vmatpush1.msra.mxu0 0.0
    %91 = vmatprep.subr.mxu0 0.0
    %92 = vmatpush1.msra.mxu0 0.0
    %93 = vmatprep.subr.mxu0 0.0
    %94 = vmatpush1.msra.mxu0 0.0
    %95 = vmatprep.subr.mxu0 0.0
    %96 = vmatpush1.msra.mxu0 0.0
    %97 = vmatprep.subr.mxu0 0.0
    %98 = vmatpush1.msra.mxu0 0.0
    %99 = vmatprep.subr.mxu0 0.0
    %100 = vmatpush1.msra.mxu0 0.0
    %101 = vmatprep.subr.mxu0 0.0
    %102 = vmatpush1.msra.mxu0 0.0
    %103 = vmatprep.subr.mxu0 0.0
    %104 = vmatpush1.msra.mxu0 0.0
    %105 = vmatprep.subr.mxu0 0.0
    %106 = vmatpush1.msra.mxu0 0.0
    %107 = vmatprep.subr.mxu0 0.0
    %108 = vmatpush1.msra.mxu0 0.0
    %109 = vmatprep.subr.mxu0 0.0
    %110 = vmatpush1.msra.mxu0 0.0
    %111 = vmatprep.subr.mxu0 0.0
    %112 = vmatpush1.msra.mxu0 0.0
    %113 = vmatprep.subr.mxu0 0.0
    %114 = vmatpush1.msra.mxu0 0.0
    %115 = vmatprep.subr.mxu0 0.0
    %116 = vmatpush1.msra.mxu0 0.0
    %117 = vmatprep.subr.mxu0 0.0
    %118 = vmatpush1.msra.mxu0 0.0
    %119 = vmatprep.subr.mxu0 0.0
    %120 = vmatpush1.msra.mxu0 0.0
    %121 = vmatprep.subr.mxu0 0.0
    %122 = vmatpush1.msra.mxu0 0.0
    %123 = vmatprep.subr.mxu0 0.0
    %124 = vmatpush1.msra.mxu0 0.0
    %125 = vmatprep.subr.mxu0 0.0
    %126 = vmatpush1.msra.mxu0 0.0
    %127 = vmatprep.mubr.f32.mxu0 0.0
    %128 = vmatmul.mubr.f32.gmra.mrb[0].mxu0 %v58
    %v129 = vpop.f32.mrb[0].mxu0
    %v130 = vadd.f32 %v54, %v129
    %v131 = vpop.f32.mrb[0].mxu0
    %132 = vmatprep.mubr.f32.mxu0 0.0
    %133 = vmatmul.mubr.f32.gmra.mrb[0].mxu0 %v61
    %v134 = vpop.f32.mrb[0].mxu0
    %v135 = vadd.f32 %v54, %v134
    %v136 = vpop.f32.mrb[0].mxu0
    %137 = vdwg.mxu0
    %vm138 = vcmask 785408
    %139 = vst.msk [vmem:[#allocation7] sm:$0xff] %vm138, %v130
    %140 = vst.msk [vmem:[#allocation7 + $0x8] sm:$0xff] %vm138, %v135
    // Predicated region
    $region22: #{tpu_custom_call.1} parent=1 // pred_check
      _
    $region23: #{tpu_custom_call.1} parent=1 // pred_check_branch
      %142 = sbr.rel (0) target = $region25
    $region24: #{tpu_custom_call.1} parent=1 // pred_region
      %s144 = ssub.s32 256, 256
      %145 = vsyncadd [#allocation4], %s144
      %s146 = sshll.u32 [#allocation7], 4
      %s147 = int_to_ptr.vmem [resolvable:$true] %s146
      %152 = dma.vmem_to_hbm [thread:$0]  %s147, 256, %s3, [#allocation4], 128, 128, 8
    $region25: #{tpu_custom_call.1} parent=1 // pred_fallthru
      _
    // Predicated region
    $region26: #{tpu_custom_call.1} parent=1 // pred_check
      _
    $region27: #{tpu_custom_call.1} parent=1 // pred_check_branch
      %154 = sbr.rel (0) target = $region29
    $region28: #{tpu_custom_call.1} parent=1 // pred_region
      %155 = dma.done [#allocation4], 256
    $region29: #{tpu_custom_call.1} parent=1 // pred_fallthru
      _
    %156 = vsyncpa [#allocation3], 1
    %157 = vsyncpa [#allocation6], 1
    %158 = vsyncpa [#allocation4], 1

</llo_original>
